<compile_context>
chip_gen: v5e
topology: v5e:2x2
jax: 0.10.0
libtpu: 0.0.40
codegen_flags: <defaults>
</compile_context>

<pallas_src>
import functools

import jax
import jax.numpy as jnp
from jax.experimental import pallas as pl
from jax.experimental.pallas import tpu as pltpu


def _round_up(x, m):
    return (x + m - 1) // m * m


def _log_sigmoid(x):
    # Numerically stable logsigmoid(x) = min(x, 0) - log1p(exp(-|x|)).
    return jnp.minimum(x, 0.0) - jnp.log1p(jnp.exp(-jnp.abs(x)))


def sgns_loss_kernel(in_ref, ctx_ref, out_ref, *, num_pos):
    """Per-batch-tile SGNS loss, batch-on-lanes layout.

    in_ref:  (E, TB)      center-word embeddings (table dtype)
    ctx_ref: (E, C, TB)   C = P + N  (positives first, then negatives)
    out_ref: (1, TB) f32  -(sum_j logsigmoid(+/- <ctx_j, in>)) per batch lane
    """
    x = in_ref[...].astype(jnp.float32)           # (E, TB)
    c = ctx_ref[...].astype(jnp.float32)          # (E, C, TB)

    # score[j, b] = sum_e ctx[e, j, b] * in[e, b]
    # VPU broadcast-multiply + adds over E; MXU would be idle at output
    # width 1, so keep this off the matrix unit.
    s = jnp.sum(c * x[:, None, :], axis=0)        # (C, TB)

    # First `num_pos` rows are positives (+score), the rest negatives
    # (-score): one fused logsigmoid / reduction pass covers both.
    row = jax.lax.broadcasted_iota(jnp.int32, s.shape, 0)
    s = jnp.where(row < num_pos, s, -s)

    ls = _log_sigmoid(s)                          # (C, TB)
    # Lane-dense (1, TB) store: full-width vst, no masked partial stores.
    out_ref[...] = -jnp.sum(ls, axis=0, keepdims=True)


def _choose_batch_tile(batch, n_ctx, embed, itemsize, vmem_cap):
    """Pick the batch tile TB (lane axis) and padded batch size."""
    b8 = _round_up(batch, 8)
    if b8 <= 128:
        return b8, b8                 # single tile; block == full array dims
    # Budget ~1/4 of VMEM for the double-buffered input blocks; the rest is
    # headroom for output blocks and in-kernel temporaries.  On v7x
    # (64 MiB VMEM) this yields ~half the tile size of v5e/v6e (128 MiB).
    budget = vmem_cap // 4
    per_lane = 2 * (n_ctx + 1) * embed * itemsize      # 2x: double buffering
    tb = max(128, min(1024, (budget // per_lane) // 128 * 128))
    tb = min(tb, _round_up(batch, 128))
    return tb, _round_up(batch, tb)


def embedding_model_forward(in_embed_w, out_embed_w,
                            input_labels, pos_labels, neg_labels,
                            *, tile_b=None):
    """JAX/Pallas equivalent of EmbeddingModel.forward. Returns loss [B]."""
    _, embed = out_embed_w.shape
    batch = input_labels.shape[0]
    n_pos = pos_labels.shape[1]
    n_neg = neg_labels.shape[1]
    n_ctx = n_pos + n_neg

    try:
        vmem_cap = pltpu.get_tpu_info().vmem_capacity_bytes
    except Exception:
        vmem_cap = 64 * 1024 * 1024   # conservative (v7x-sized) default

    itemsize = jnp.dtype(out_embed_w.dtype).itemsize
    if tile_b is None:
        tb, b_pad = _choose_batch_tile(batch, n_ctx, embed, itemsize, vmem_cap)
    else:
        tb = tile_b
        b_pad = _round_up(batch, tb)

    # Pad the (cheap) label arrays instead of the gathered activations; padded
    # lanes gather row 0, compute a throwaway loss, and are sliced off below.
    pad = b_pad - batch
    input_labels_p = jnp.pad(input_labels, (0, pad))
    ctx_labels = jnp.concatenate([pos_labels, neg_labels], axis=1)   # (B, C)
    ctx_labels_p = jnp.pad(ctx_labels, ((0, pad), (0, 0)))           # (Bp, C)

    # Embedding lookups (XLA gather; data movement only).  Gather with the
    # embedding dim leading so the kernel sees a batch-on-lanes layout: with
    # E < 128, an E-minor layout would waste (1 - E/128) of every vreg.
    # Tables are kept in their native dtype through HBM (bf16 tables halve
    # traffic); the kernel upcasts to f32.  In production, store the tables
    # E-major to avoid the transposes here.
    in_t = jnp.take(in_embed_w.T, input_labels_p, axis=1)            # (E, Bp)
    ctx_t = jnp.take(out_embed_w.T, ctx_labels_p.T, axis=1)          # (E, C, Bp)

    grid = (b_pad // tb,)
    out = pl.pallas_call(
        functools.partial(sgns_loss_kernel, num_pos=n_pos),
        out_shape=jax.ShapeDtypeStruct((1, b_pad), jnp.float32),
        grid=grid,
        in_specs=[
            pl.BlockSpec((embed, tb), lambda i: (0, i)),
            pl.BlockSpec((embed, n_ctx, tb), lambda i: (0, 0, i)),
        ],
        out_specs=pl.BlockSpec((1, tb), lambda i: (0, i)),
        compiler_params=pltpu.CompilerParams(
            # Batch tiles are independent -> shard across TensorCores on v7x.
            dimension_semantics=("parallel",),
            vmem_limit_bytes=int(min(vmem_cap // 2, 96 * 1024 * 1024)),
        ),
    )(in_t, ctx_t)

    return out[0, :batch]                                            # (B,)


def _reference(in_embed_w, out_embed_w, input_labels, pos_labels, neg_labels):
    in_emb = jnp.take(in_embed_w, input_labels, axis=0)
    pos_emb = jnp.take(out_embed_w, pos_labels, axis=0)
    neg_emb = jnp.take(out_embed_w, neg_labels, axis=0)
    log_pos = jnp.einsum('bpe,be->bp', pos_emb, in_emb)
    log_neg = jnp.einsum('bne,be->bn', neg_emb, -in_emb)
    lp = jax.nn.log_sigmoid(log_pos).sum(1)
    ln = jax.nn.log_sigmoid(log_neg).sum(1)
    return -(lp + ln)


if __name__ == "__main__":
    # Small shapes consistent with the module's forward.
    VOCAB = 64       # vocab_size
    EMBED = 32       # embed_size
    B = 2            # batch
    P = 8            # window_size * 2
    N = 16           # window_size * 2 * K  (K = 2)

    key = jax.random.PRNGKey(0)
    k_out, k_in, k_lbl, k_pos, k_neg, k_big = jax.random.split(key, 6)

    initrange = 0.5 / EMBED
    out_embed_w = jax.random.uniform(
        k_out, (VOCAB, EMBED), jnp.float32, minval=-initrange, maxval=initrange)
    in_embed_w = jax.random.uniform(
        k_in, (VOCAB, EMBED), jnp.float32, minval=-initrange, maxval=initrange)

    input_labels = jax.random.randint(k_lbl, (B,), 0, VOCAB, dtype=jnp.int32)
    pos_labels = jax.random.randint(k_pos, (B, P), 0, VOCAB, dtype=jnp.int32)
    neg_labels = jax.random.randint(k_neg, (B, N), 0, VOCAB, dtype=jnp.int32)

    loss = embedding_model_forward(
        in_embed_w, out_embed_w, input_labels, pos_labels, neg_labels)
    loss = jax.block_until_ready(loss)
    ref = _reference(in_embed_w, out_embed_w, input_labels, pos_labels, neg_labels)
    assert loss.shape == (B,), loss.shape
    assert jnp.allclose(loss, ref, atol=1e-5, rtol=1e-5), (loss, ref)

    # Larger batch: exercises batch tiling, padding of the ragged last tile
    # and the megacore-parallel grid (3 tiles of 128 lanes).
    B2 = 300
    ka, kb, kc = jax.random.split(k_big, 3)
    inp2 = jax.random.randint(ka, (B2,), 0, VOCAB, dtype=jnp.int32)
    pos2 = jax.random.randint(kb, (B2, P), 0, VOCAB, dtype=jnp.int32)
    neg2 = jax.random.randint(kc, (B2, N), 0, VOCAB, dtype=jnp.int32)
    loss2 = jax.block_until_ready(
        embedding_model_forward(in_embed_w, out_embed_w, inp2, pos2, neg2,
                                tile_b=128))
    ref2 = _reference(in_embed_w, out_embed_w, inp2, pos2, neg2)
    assert loss2.shape == (B2,), loss2.shape
    assert jnp.allclose(loss2, ref2, atol=1e-5, rtol=1e-5), (loss2, ref2)

    print("KERNEL_OK")
</pallas_src>

<mosaic_0001>
module attributes {stable_mosaic.version = 11 : i64} {
  func.func @sgns_loss_kernel(%arg0: i32, %arg1: memref<32x8xf32, #tpu.memory_space<vmem>>, %arg2: memref<32x24x8xf32, #tpu.memory_space<vmem>>, %arg3: memref<1x8xf32, #tpu.memory_space<vmem>>) attributes {dimension_semantics = [#tpu.dimension_semantics<parallel>], iteration_bounds = array<i64: 1>, scalar_prefetch = 0 : i64, scratch_operands = 0 : i64, tpu.core_type = #tpu.core_type<tc>, window_params = [{transform_indices = @transform_0, window_bounds = array<i64: 32, 8>}, {transform_indices = @transform_1, window_bounds = array<i64: 32, 24, 8>}, {transform_indices = @transform_2, window_bounds = array<i64: 1, 8>}]} {
    %c0 = arith.constant 0 : index
    %c0_0 = arith.constant 0 : index
    %0 = vector.load %arg1[%c0, %c0_0] : memref<32x8xf32, #tpu.memory_space<vmem>>, vector<32x8xf32>
    %c0_1 = arith.constant 0 : index
    %c0_2 = arith.constant 0 : index
    %c0_3 = arith.constant 0 : index
    %1 = vector.load %arg2[%c0_1, %c0_2, %c0_3] : memref<32x24x8xf32, #tpu.memory_space<vmem>>, vector<32x24x8xf32>
    %2 = vector.shape_cast %0 : vector<32x8xf32> to vector<32x1x8xf32>
    %3 = vector.broadcast %2 : vector<32x1x8xf32> to vector<32x24x8xf32>
    %4 = arith.mulf %1, %3 : vector<32x24x8xf32>
    %cst = arith.constant dense<0.000000e+00> : vector<24x8xf32>
    %5 = vector.multi_reduction <add>, %4, %cst [0] : vector<32x24x8xf32> to vector<24x8xf32>
    %6 = tpu.iota {dimensions = array<i32: 0>} : vector<24x8xi32>
    %c8_i32 = arith.constant 8 : i32
    %7 = vector.broadcast %c8_i32 : i32 to vector<24x8xi32>
    %8 = arith.cmpi slt, %6, %7 : vector<24x8xi32>
    %cst_4 = arith.constant 0.000000e+00 : f32
    %9 = vector.broadcast %cst_4 : f32 to vector<24x8xf32>
    %10 = arith.subf %9, %5 : vector<24x8xf32>
    %11 = arith.select %8, %5, %10 : vector<24x8xi1>, vector<24x8xf32>
    %cst_5 = arith.constant 0.000000e+00 : f32
    %12 = vector.broadcast %cst_5 : f32 to vector<24x8xf32>
    %13 = arith.minimumf %11, %12 : vector<24x8xf32>
    %14 = math.absf %11 : vector<24x8xf32>
    %cst_6 = arith.constant 0.000000e+00 : f32
    %15 = vector.broadcast %cst_6 : f32 to vector<24x8xf32>
    %16 = arith.subf %15, %14 : vector<24x8xf32>
    %17 = math.exp %16 : vector<24x8xf32>
    %18 = math.log1p %17 : vector<24x8xf32>
    %19 = arith.subf %13, %18 : vector<24x8xf32>
    %cst_7 = arith.constant dense<0.000000e+00> : vector<8xf32>
    %20 = vector.multi_reduction <add>, %19, %cst_7 [0] : vector<24x8xf32> to vector<8xf32>
    %21 = vector.shape_cast %20 : vector<8xf32> to vector<1x8xf32>
    %cst_8 = arith.constant 0.000000e+00 : f32
    %22 = vector.broadcast %cst_8 : f32 to vector<1x8xf32>
    %23 = arith.subf %22, %21 : vector<1x8xf32>
    %c0_9 = arith.constant 0 : index
    %c0_10 = arith.constant 0 : index
    %24 = vector.load %arg3[%c0_9, %c0_10] : memref<1x8xf32, #tpu.memory_space<vmem>>, vector<1x8xf32>
    tpu.vector_store %arg3[%c0_9, %c0_10], %23 {strides = array<i32>} : memref<1x8xf32, #tpu.memory_space<vmem>>, vector<1x8xf32>,
    return
  }
  func.func @transform_0(%arg0: i32) -> (i32, i32) {
    %c0_i32 = arith.constant 0 : i32
    %c0_i32_0 = arith.constant 0 : i32
    return %c0_i32, %arg0 : i32, i32
  }
  func.func @transform_1(%arg0: i32) -> (i32, i32, i32) {
    %c0_i32 = arith.constant 0 : i32
    %c0_i32_0 = arith.constant 0 : i32
    %c0_i32_1 = arith.constant 0 : i32
    return %c0_i32, %c0_i32_0, %arg0 : i32, i32, i32
  }
  func.func @transform_2(%arg0: i32) -> (i32, i32) {
    %c0_i32 = arith.constant 0 : i32
    %c0_i32_0 = arith.constant 0 : i32
    return %c0_i32, %arg0 : i32, i32
  }
}

</mosaic_0001>

<llo_original>
// kernel: tpu_custom_call.1
$region0: #{tpu_custom_call.1}
  #allocation0 [shape = 'u32[]', space=smem, size = 0x4, offset = 0x4, fixed_abs, tag = 'smem constant byte address 0x4 - core index']
  #allocation1 [shape = 'u32[72,128]{1,0:T(1,128)}', space=vmem, size = 0x9000, scoped, tag = 'internal scratch']
  %s0 = inlined_call_operand.vmem [shape: f32[32,8], index: 0, kind: input, shape index: {}]
  %s1 = inlined_call_operand.vmem [shape: f32[32,24,8], index: 1, kind: input, shape index: {}]
  %s2 = inlined_call_operand.hbm [shape: f32[1,8], index: 2, kind: output, shape index: {}]
  %s3 = sld [smem:[#allocation0]]
  $region18: #{tpu_custom_call.1} parent=0
    _
  %s5 = ssub.s32 1, %s3
  %s6 = scalar_select 0, %s5, %s3
  $region1: #{tpu_custom_call.1} parent=0
    #allocation2 [shape = 'u8[512]{0}', space=vmem, size = 0x400, scoped, tag = 'output window, operand 0, single buffered']
    #allocation3 [shape = 's32[1]{0}', space=sflag, size = 0x4, scoped, tag = 'scoped memory for tpu_custom_call.1']
    %7 = vsyncpa [#allocation3], 0
    // Predicated region
    $region2: #{tpu_custom_call.1} parent=1 // pred_check
      _
    $region3: #{tpu_custom_call.1} parent=1 // pred_check_branch
      %9 = sbr.rel (0) target = $region5
    $region4: #{tpu_custom_call.1} parent=1 // pred_region
      _
    $region5: #{tpu_custom_call.1} parent=1 // pred_fallthru
      _
    // Predicated region
    $region6: #{tpu_custom_call.1} parent=1 // pred_check
      _
    $region7: #{tpu_custom_call.1} parent=1 // pred_check_branch
      %11 = sbr.rel (0) target = $region9
    $region8: #{tpu_custom_call.1} parent=1 // pred_region
      _
    $region9: #{tpu_custom_call.1} parent=1 // pred_fallthru
      _
    %v12 = vld [vmem:[%s0] sm:$0xff]
    %v13 = vld [vmem:[%s0 + $0x8] sm:$0xff]
    %v14 = vld [vmem:[%s0 + $0x10] sm:$0xff]
    %v15 = vld [vmem:[%s0 + $0x18] sm:$0xff]
    %v16 = vld [vmem:[%s1] sm:$0xff]
    %v17 = vld [vmem:[%s1 + $0x8] sm:$0xff]
    %v18 = vld [vmem:[%s1 + $0x10] sm:$0xff]
    %v19 = vld [vmem:[%s1 + $0x18] sm:$0xff]
    %v20 = vld [vmem:[%s1 + $0x20] sm:$0xff]
    %v21 = vld [vmem:[%s1 + $0x28] sm:$0xff]
    %v22 = vld [vmem:[%s1 + $0x30] sm:$0xff]
    %v23 = vld [vmem:[%s1 + $0x38] sm:$0xff]
    %v24 = vld [vmem:[%s1 + $0x40] sm:$0xff]
    %v25 = vld [vmem:[%s1 + $0x48] sm:$0xff]
    %v26 = vld [vmem:[%s1 + $0x50] sm:$0xff]
    %v27 = vld [vmem:[%s1 + $0x58] sm:$0xff]
    %v28 = vld [vmem:[%s1 + $0x60] sm:$0xff]
    %v29 = vld [vmem:[%s1 + $0x68] sm:$0xff]
    %v30 = vld [vmem:[%s1 + $0x70] sm:$0xff]
    %v31 = vld [vmem:[%s1 + $0x78] sm:$0xff]
    %v32 = vld [vmem:[%s1 + $0x80] sm:$0xff]
    %v33 = vld [vmem:[%s1 + $0x88] sm:$0xff]
    %v34 = vld [vmem:[%s1 + $0x90] sm:$0xff]
    %v35 = vld [vmem:[%s1 + $0x98] sm:$0xff]
    %v36 = vld [vmem:[%s1 + $0xa0] sm:$0xff]
    %v37 = vld [vmem:[%s1 + $0xa8] sm:$0xff]
    %v38 = vld [vmem:[%s1 + $0xb0] sm:$0xff]
    %v39 = vld [vmem:[%s1 + $0xb8] sm:$0xff]
    %v40 = vld [vmem:[%s1 + $0xc0] sm:$0xff]
    %v41 = vld [vmem:[%s1 + $0xc8] sm:$0xff]
    %v42 = vld [vmem:[%s1 + $0xd0] sm:$0xff]
    %v43 = vld [vmem:[%s1 + $0xd8] sm:$0xff]
    %v44 = vld [vmem:[%s1 + $0xe0] sm:$0xff]
    %v45 = vld [vmem:[%s1 + $0xe8] sm:$0xff]
    %v46 = vld [vmem:[%s1 + $0xf0] sm:$0xff]
    %v47 = vld [vmem:[%s1 + $0xf8] sm:$0xff]
    %v48 = vld [vmem:[%s1 + $0x100] sm:$0xff]
    %v49 = vld [vmem:[%s1 + $0x108] sm:$0xff]
    %v50 = vld [vmem:[%s1 + $0x110] sm:$0xff]
    %v51 = vld [vmem:[%s1 + $0x118] sm:$0xff]
    %v52 = vld [vmem:[%s1 + $0x120] sm:$0xff]
    %v53 = vld [vmem:[%s1 + $0x128] sm:$0xff]
    %v54 = vld [vmem:[%s1 + $0x130] sm:$0xff]
    %v55 = vld [vmem:[%s1 + $0x138] sm:$0xff]
    %v56 = vld [vmem:[%s1 + $0x140] sm:$0xff]
    %v57 = vld [vmem:[%s1 + $0x148] sm:$0xff]
    %v58 = vld [vmem:[%s1 + $0x150] sm:$0xff]
    %v59 = vld [vmem:[%s1 + $0x158] sm:$0xff]
    %v60 = vld [vmem:[%s1 + $0x160] sm:$0xff]
    %v61 = vld [vmem:[%s1 + $0x168] sm:$0xff]
    %v62 = vld [vmem:[%s1 + $0x170] sm:$0xff]
    %v63 = vld [vmem:[%s1 + $0x178] sm:$0xff]
    %v64 = vld [vmem:[%s1 + $0x180] sm:$0xff]
    %v65 = vld [vmem:[%s1 + $0x188] sm:$0xff]
    %v66 = vld [vmem:[%s1 + $0x190] sm:$0xff]
    %v67 = vld [vmem:[%s1 + $0x198] sm:$0xff]
    %v68 = vld [vmem:[%s1 + $0x1a0] sm:$0xff]
    %v69 = vld [vmem:[%s1 + $0x1a8] sm:$0xff]
    %v70 = vld [vmem:[%s1 + $0x1b0] sm:$0xff]
    %v71 = vld [vmem:[%s1 + $0x1b8] sm:$0xff]
    %v72 = vld [vmem:[%s1 + $0x1c0] sm:$0xff]
    %v73 = vld [vmem:[%s1 + $0x1c8] sm:$0xff]
    %v74 = vld [vmem:[%s1 + $0x1d0] sm:$0xff]
    %v75 = vld [vmem:[%s1 + $0x1d8] sm:$0xff]
    %v76 = vld [vmem:[%s1 + $0x1e0] sm:$0xff]
    %v77 = vld [vmem:[%s1 + $0x1e8] sm:$0xff]
    %v78 = vld [vmem:[%s1 + $0x1f0] sm:$0xff]
    %v79 = vld [vmem:[%s1 + $0x1f8] sm:$0xff]
    %v80 = vld [vmem:[%s1 + $0x200] sm:$0xff]
    %v81 = vld [vmem:[%s1 + $0x208] sm:$0xff]
    %v82 = vld [vmem:[%s1 + $0x210] sm:$0xff]
    %v83 = vld [vmem:[%s1 + $0x218] sm:$0xff]
    %v84 = vld [vmem:[%s1 + $0x220] sm:$0xff]
    %v85 = vld [vmem:[%s1 + $0x228] sm:$0xff]
    %v86 = vld [vmem:[%s1 + $0x230] sm:$0xff]
    %v87 = vld [vmem:[%s1 + $0x238] sm:$0xff]
    %v88 = vld [vmem:[%s1 + $0x240] sm:$0xff]
    %v89 = vld [vmem:[%s1 + $0x248] sm:$0xff]
    %v90 = vld [vmem:[%s1 + $0x250] sm:$0xff]
    %v91 = vld [vmem:[%s1 + $0x258] sm:$0xff]
    %v92 = vld [vmem:[%s1 + $0x260] sm:$0xff]
    %v93 = vld [vmem:[%s1 + $0x268] sm:$0xff]
    %v94 = vld [vmem:[%s1 + $0x270] sm:$0xff]
    %v95 = vld [vmem:[%s1 + $0x278] sm:$0xff]
    %v96 = vld [vmem:[%s1 + $0x280] sm:$0xff]
    %v97 = vld [vmem:[%s1 + $0x288] sm:$0xff]
    %v98 = vld [vmem:[%s1 + $0x290] sm:$0xff]
    %v99 = vld [vmem:[%s1 + $0x298] sm:$0xff]
    %v100 = vld [vmem:[%s1 + $0x2a0] sm:$0xff]
    %v101 = vld [vmem:[%s1 + $0x2a8] sm:$0xff]
    %v102 = vld [vmem:[%s1 + $0x2b0] sm:$0xff]
    %v103 = vld [vmem:[%s1 + $0x2b8] sm:$0xff]
    %v104 = vld [vmem:[%s1 + $0x2c0] sm:$0xff]
    %v105 = vld [vmem:[%s1 + $0x2c8] sm:$0xff]
    %v106 = vld [vmem:[%s1 + $0x2d0] sm:$0xff]
    %v107 = vld [vmem:[%s1 + $0x2d8] sm:$0xff]
    %v108 = vld [vmem:[%s1 + $0x2e0] sm:$0xff]
    %v109 = vld [vmem:[%s1 + $0x2e8] sm:$0xff]
    %v110 = vld [vmem:[%s1 + $0x2f0] sm:$0xff]
    %v111 = vld [vmem:[%s1 + $0x2f8] sm:$0xff]
    %v116 = vrot.slane %v12, 1
    %v117 = vrot.slane %v12, 2
    %v118 = vrot.slane %v12, 3
    %v119 = vrot.slane %v12, 4
    %v120 = vrot.slane %v12, 5
    %v121 = vrot.slane %v12, 6
    %v122 = vrot.slane %v12, 7
    %v123 = vrot.slane %v13, 1
    %v124 = vrot.slane %v13, 2
    %v125 = vrot.slane %v13, 3
    %v126 = vrot.slane %v13, 4
    %v127 = vrot.slane %v13, 5
    %v128 = vrot.slane %v13, 6
    %v129 = vrot.slane %v13, 7
    %v130 = vrot.slane %v14, 1
    %v131 = vrot.slane %v14, 2
    %v132 = vrot.slane %v14, 3
    %v133 = vrot.slane %v14, 4
    %v134 = vrot.slane %v14, 5
    %v135 = vrot.slane %v14, 6
    %v136 = vrot.slane %v14, 7
    %v137 = vrot.slane %v15, 1
    %v138 = vrot.slane %v15, 2
    %v139 = vrot.slane %v15, 3
    %v140 = vrot.slane %v15, 4
    %v141 = vrot.slane %v15, 5
    %v142 = vrot.slane %v15, 6
    %v143 = vrot.slane %v15, 7
    %v144 = vperm.slane %v12, 0
    %v145 = vperm.slane %v116, 0
    %v146 = vperm.slane %v117, 0
    %v147 = vperm.slane %v118, 0
    %v148 = vperm.slane %v119, 0
    %v149 = vperm.slane %v120, 0
    %v150 = vperm.slane %v121, 0
    %v151 = vperm.slane %v122, 0
    %v152 = vperm.slane %v13, 0
    %v153 = vperm.slane %v123, 0
    %v154 = vperm.slane %v124, 0
    %v155 = vperm.slane %v125, 0
    %v156 = vperm.slane %v126, 0
    %v157 = vperm.slane %v127, 0
    %v158 = vperm.slane %v128, 0
    %v159 = vperm.slane %v129, 0
    %v160 = vperm.slane %v14, 0
    %v161 = vperm.slane %v130, 0
    %v162 = vperm.slane %v131, 0
    %v163 = vperm.slane %v132, 0
    %v164 = vperm.slane %v133, 0
    %v165 = vperm.slane %v134, 0
    %v166 = vperm.slane %v135, 0
    %v167 = vperm.slane %v136, 0
    %v168 = vperm.slane %v15, 0
    %v169 = vperm.slane %v137, 0
    %v170 = vperm.slane %v138, 0
    %v171 = vperm.slane %v139, 0
    %v172 = vperm.slane %v140, 0
    %v173 = vperm.slane %v141, 0
    %v174 = vperm.slane %v142, 0
    %v175 = vperm.slane %v143, 0
    %v208 = vmul.f32 %v16, %v144
    %v209 = vmul.f32 %v17, %v144
    %v210 = vmul.f32 %v18, %v144
    %v211 = vmul.f32 %v19, %v145
    %v212 = vmul.f32 %v20, %v145
    %v213 = vmul.f32 %v21, %v145
    %v214 = vmul.f32 %v22, %v146
    %v215 = vmul.f32 %v23, %v146
    %v216 = vmul.f32 %v24, %v146
    %v217 = vmul.f32 %v25, %v147
    %v218 = vmul.f32 %v26, %v147
    %v219 = vmul.f32 %v27, %v147
    %v220 = vmul.f32 %v28, %v148
    %v221 = vmul.f32 %v29, %v148
    %v222 = vmul.f32 %v30, %v148
    %v223 = vmul.f32 %v31, %v149
    %v224 = vmul.f32 %v32, %v149
    %v225 = vmul.f32 %v33, %v149
    %v226 = vmul.f32 %v34, %v150
    %v227 = vmul.f32 %v35, %v150
    %v228 = vmul.f32 %v36, %v150
    %v229 = vmul.f32 %v37, %v151
    %v230 = vmul.f32 %v38, %v151
    %v231 = vmul.f32 %v39, %v151
    %v232 = vmul.f32 %v40, %v152
    %v233 = vmul.f32 %v41, %v152
    %v234 = vmul.f32 %v42, %v152
    %v235 = vmul.f32 %v43, %v153
    %v236 = vmul.f32 %v44, %v153
    %v237 = vmul.f32 %v45, %v153
    %v238 = vmul.f32 %v46, %v154
    %v239 = vmul.f32 %v47, %v154
    %v240 = vmul.f32 %v48, %v154
    %v241 = vmul.f32 %v49, %v155
    %v242 = vmul.f32 %v50, %v155
    %v243 = vmul.f32 %v51, %v155
    %v244 = vmul.f32 %v52, %v156
    %v245 = vmul.f32 %v53, %v156
    %v246 = vmul.f32 %v54, %v156
    %v247 = vmul.f32 %v55, %v157
    %v248 = vmul.f32 %v56, %v157
    %v249 = vmul.f32 %v57, %v157
    %v250 = vmul.f32 %v58, %v158
    %v251 = vmul.f32 %v59, %v158
    %v252 = vmul.f32 %v60, %v158
    %v253 = vmul.f32 %v61, %v159
    %v254 = vmul.f32 %v62, %v159
    %v255 = vmul.f32 %v63, %v159
    %v256 = vmul.f32 %v64, %v160
    %v257 = vmul.f32 %v65, %v160
    %v258 = vmul.f32 %v66, %v160
    %v259 = vmul.f32 %v67, %v161
    %v260 = vmul.f32 %v68, %v161
    %v261 = vmul.f32 %v69, %v161
    %v262 = vmul.f32 %v70, %v162
    %v263 = vmul.f32 %v71, %v162
    %v264 = vmul.f32 %v72, %v162
    %v265 = vmul.f32 %v73, %v163
    %v266 = vmul.f32 %v74, %v163
    %v267 = vmul.f32 %v75, %v163
    %v268 = vmul.f32 %v76, %v164
    %v269 = vmul.f32 %v77, %v164
    %v270 = vmul.f32 %v78, %v164
    %v271 = vmul.f32 %v79, %v165
    %v272 = vmul.f32 %v80, %v165
    %v273 = vmul.f32 %v81, %v165
    %v274 = vmul.f32 %v82, %v166
    %v275 = vmul.f32 %v83, %v166
    %v276 = vmul.f32 %v84, %v166
    %v277 = vmul.f32 %v85, %v167
    %v278 = vmul.f32 %v86, %v167
    %v279 = vmul.f32 %v87, %v167
    %v280 = vmul.f32 %v88, %v168
    %v281 = vmul.f32 %v89, %v168
    %v282 = vmul.f32 %v90, %v168
    %v283 = vmul.f32 %v91, %v169
    %v284 = vmul.f32 %v92, %v169
    %v285 = vmul.f32 %v93, %v169
    %v286 = vmul.f32 %v94, %v170
    %v287 = vmul.f32 %v95, %v170
    %v288 = vmul.f32 %v96, %v170
    %v289 = vmul.f32 %v97, %v171
    %v290 = vmul.f32 %v98, %v171
    %v291 = vmul.f32 %v99, %v171
    %v292 = vmul.f32 %v100, %v172
    %v293 = vmul.f32 %v101, %v172
    %v294 = vmul.f32 %v102, %v172
    %v295 = vmul.f32 %v103, %v173
    %v296 = vmul.f32 %v104, %v173
    %v297 = vmul.f32 %v105, %v173
    %v298 = vmul.f32 %v106, %v174
    %v299 = vmul.f32 %v107, %v174
    %v300 = vmul.f32 %v108, %v174
    %v301 = vmul.f32 %v109, %v175
    %v302 = vmul.f32 %v110, %v175
    %v303 = vmul.f32 %v111, %v175
    %vm304 = vcmask 64512
    %v305 = vsel %vm304, %v208, 0.0
    %v306 = vsel %vm304, %v211, 0.0
    %v307 = vadd.f32 %v305, %v306
    %v308 = vsel %vm304, %v214, 0.0
    %v309 = vadd.f32 %v307, %v308
    %v310 = vsel %vm304, %v217, 0.0
    %v311 = vadd.f32 %v309, %v310
    %v312 = vsel %vm304, %v220, 0.0
    %v313 = vadd.f32 %v311, %v312
    %v314 = vsel %vm304, %v223, 0.0
    %v315 = vadd.f32 %v313, %v314
    %v316 = vsel %vm304, %v226, 0.0
    %v317 = vadd.f32 %v315, %v316
    %v318 = vsel %vm304, %v229, 0.0
    %v319 = vadd.f32 %v317, %v318
    %v320 = vsel %vm304, %v232, 0.0
    %v321 = vadd.f32 %v319, %v320
    %v322 = vsel %vm304, %v235, 0.0
    %v323 = vadd.f32 %v321, %v322
    %v324 = vsel %vm304, %v238, 0.0
    %v325 = vadd.f32 %v323, %v324
    %v326 = vsel %vm304, %v241, 0.0
    %v327 = vadd.f32 %v325, %v326
    %v328 = vsel %vm304, %v244, 0.0
    %v329 = vadd.f32 %v327, %v328
    %v330 = vsel %vm304, %v247, 0.0
    %v331 = vadd.f32 %v329, %v330
    %v332 = vsel %vm304, %v250, 0.0
    %v333 = vadd.f32 %v331, %v332
    %v334 = vsel %vm304, %v253, 0.0
    %v335 = vadd.f32 %v333, %v334
    %v336 = vsel %vm304, %v256, 0.0
    %v337 = vadd.f32 %v335, %v336
    %v338 = vsel %vm304, %v259, 0.0
    %v339 = vadd.f32 %v337, %v338
    %v340 = vsel %vm304, %v262, 0.0
    %v341 = vadd.f32 %v339, %v340
    %v342 = vsel %vm304, %v265, 0.0
    %v343 = vadd.f32 %v341, %v342
    %v344 = vsel %vm304, %v268, 0.0
    %v345 = vadd.f32 %v343, %v344
    %v346 = vsel %vm304, %v271, 0.0
    %v347 = vadd.f32 %v345, %v346
    %v348 = vsel %vm304, %v274, 0.0
    %v349 = vadd.f32 %v347, %v348
    %v350 = vsel %vm304, %v277, 0.0
    %v351 = vadd.f32 %v349, %v350
    %v352 = vsel %vm304, %v280, 0.0
    %v353 = vadd.f32 %v351, %v352
    %v354 = vsel %vm304, %v283, 0.0
    %v355 = vadd.f32 %v353, %v354
    %v356 = vsel %vm304, %v286, 0.0
    %v357 = vadd.f32 %v355, %v356
    %v358 = vsel %vm304, %v289, 0.0
    %v359 = vadd.f32 %v357, %v358
    %v360 = vsel %vm304, %v292, 0.0
    %v361 = vadd.f32 %v359, %v360
    %v362 = vsel %vm304, %v295, 0.0
    %v363 = vadd.f32 %v361, %v362
    %v364 = vsel %vm304, %v298, 0.0
    %v365 = vadd.f32 %v363, %v364
    %v366 = vsel %vm304, %v301, 0.0
    %v367 = vadd.f32 %v365, %v366
    %v368 = vsel %vm304, %v209, 0.0
    %v369 = vsel %vm304, %v212, 0.0
    %v370 = vadd.f32 %v368, %v369
    %v371 = vsel %vm304, %v215, 0.0
    %v372 = vadd.f32 %v370, %v371
    %v373 = vsel %vm304, %v218, 0.0
    %v374 = vadd.f32 %v372, %v373
    %v375 = vsel %vm304, %v221, 0.0
    %v376 = vadd.f32 %v374, %v375
    %v377 = vsel %vm304, %v224, 0.0
    %v378 = vadd.f32 %v376, %v377
    %v379 = vsel %vm304, %v227, 0.0
    %v380 = vadd.f32 %v378, %v379
    %v381 = vsel %vm304, %v230, 0.0
    %v382 = vadd.f32 %v380, %v381
    %v383 = vsel %vm304, %v233, 0.0
    %v384 = vadd.f32 %v382, %v383
    %v385 = vsel %vm304, %v236, 0.0
    %v386 = vadd.f32 %v384, %v385
    %v387 = vsel %vm304, %v239, 0.0
    %v388 = vadd.f32 %v386, %v387
    %v389 = vsel %vm304, %v242, 0.0
    %v390 = vadd.f32 %v388, %v389
    %v391 = vsel %vm304, %v245, 0.0
    %v392 = vadd.f32 %v390, %v391
    %v393 = vsel %vm304, %v248, 0.0
    %v394 = vadd.f32 %v392, %v393
    %v395 = vsel %vm304, %v251, 0.0
    %v396 = vadd.f32 %v394, %v395
    %v397 = vsel %vm304, %v254, 0.0
    %v398 = vadd.f32 %v396, %v397
    %v399 = vsel %vm304, %v257, 0.0
    %v400 = vadd.f32 %v398, %v399
    %v401 = vsel %vm304, %v260, 0.0
    %v402 = vadd.f32 %v400, %v401
    %v403 = vsel %vm304, %v263, 0.0
    %v404 = vadd.f32 %v402, %v403
    %v405 = vsel %vm304, %v266, 0.0
    %v406 = vadd.f32 %v404, %v405
    %v407 = vsel %vm304, %v269, 0.0
    %v408 = vadd.f32 %v406, %v407
    %v409 = vsel %vm304, %v272, 0.0
    %v410 = vadd.f32 %v408, %v409
    %v411 = vsel %vm304, %v275, 0.0
    %v412 = vadd.f32 %v410, %v411
    %v413 = vsel %vm304, %v278, 0.0
    %v414 = vadd.f32 %v412, %v413
    %v415 = vsel %vm304, %v281, 0.0
    %v416 = vadd.f32 %v414, %v415
    %v417 = vsel %vm304, %v284, 0.0
    %v418 = vadd.f32 %v416, %v417
    %v419 = vsel %vm304, %v287, 0.0
    %v420 = vadd.f32 %v418, %v419
    %v421 = vsel %vm304, %v290, 0.0
    %v422 = vadd.f32 %v420, %v421
    %v423 = vsel %vm304, %v293, 0.0
    %v424 = vadd.f32 %v422, %v423
    %v425 = vsel %vm304, %v296, 0.0
    %v426 = vadd.f32 %v424, %v425
    %v427 = vsel %vm304, %v299, 0.0
    %v428 = vadd.f32 %v426, %v427
    %v429 = vsel %vm304, %v302, 0.0
    %v430 = vadd.f32 %v428, %v429
    %v431 = vsel %vm304, %v210, 0.0
    %v432 = vsel %vm304, %v213, 0.0
    %v433 = vadd.f32 %v431, %v432
    %v434 = vsel %vm304, %v216, 0.0
    %v435 = vadd.f32 %v433, %v434
    %v436 = vsel %vm304, %v219, 0.0
    %v437 = vadd.f32 %v435, %v436
    %v438 = vsel %vm304, %v222, 0.0
    %v439 = vadd.f32 %v437, %v438
    %v440 = vsel %vm304, %v225, 0.0
    %v441 = vadd.f32 %v439, %v440
    %v442 = vsel %vm304, %v228, 0.0
    %v443 = vadd.f32 %v441, %v442
    %v444 = vsel %vm304, %v231, 0.0
    %v445 = vadd.f32 %v443, %v444
    %v446 = vsel %vm304, %v234, 0.0
    %v447 = vadd.f32 %v445, %v446
    %v448 = vsel %vm304, %v237, 0.0
    %v449 = vadd.f32 %v447, %v448
    %v450 = vsel %vm304, %v240, 0.0
    %v451 = vadd.f32 %v449, %v450
    %v452 = vsel %vm304, %v243, 0.0
    %v453 = vadd.f32 %v451, %v452
    %v454 = vsel %vm304, %v246, 0.0
    %v455 = vadd.f32 %v453, %v454
    %v456 = vsel %vm304, %v249, 0.0
    %v457 = vadd.f32 %v455, %v456
    %v458 = vsel %vm304, %v252, 0.0
    %v459 = vadd.f32 %v457, %v458
    %v460 = vsel %vm304, %v255, 0.0
    %v461 = vadd.f32 %v459, %v460
    %v462 = vsel %vm304, %v258, 0.0
    %v463 = vadd.f32 %v461, %v462
    %v464 = vsel %vm304, %v261, 0.0
    %v465 = vadd.f32 %v463, %v464
    %v466 = vsel %vm304, %v264, 0.0
    %v467 = vadd.f32 %v465, %v466
    %v468 = vsel %vm304, %v267, 0.0
    %v469 = vadd.f32 %v467, %v468
    %v470 = vsel %vm304, %v270, 0.0
    %v471 = vadd.f32 %v469, %v470
    %v472 = vsel %vm304, %v273, 0.0
    %v473 = vadd.f32 %v471, %v472
    %v474 = vsel %vm304, %v276, 0.0
    %v475 = vadd.f32 %v473, %v474
    %v476 = vsel %vm304, %v279, 0.0
    %v477 = vadd.f32 %v475, %v476
    %v478 = vsel %vm304, %v282, 0.0
    %v479 = vadd.f32 %v477, %v478
    %v480 = vsel %vm304, %v285, 0.0
    %v481 = vadd.f32 %v479, %v480
    %v482 = vsel %vm304, %v288, 0.0
    %v483 = vadd.f32 %v481, %v482
    %v484 = vsel %vm304, %v291, 0.0
    %v485 = vadd.f32 %v483, %v484
    %v486 = vsel %vm304, %v294, 0.0
    %v487 = vadd.f32 %v485, %v486
    %v488 = vsel %vm304, %v297, 0.0
    %v489 = vadd.f32 %v487, %v488
    %v490 = vsel %vm304, %v300, 0.0
    %v491 = vadd.f32 %v489, %v490
    %v492 = vsel %vm304, %v303, 0.0
    %v493 = vadd.f32 %v491, %v492
    %v494 = vlaneseq
    %v495 = vshrl.u32 %v494, 7
    %v496 = vadd.s32 %v495, 8
    %v497 = vadd.s32 %v495, 16
    %vm498 = vcmp.lt.s32.totalorder %v495, 8
    %vm499 = vcmp.lt.s32.totalorder %v496, 8
    %vm500 = vcmp.lt.s32.totalorder %v497, 8
    %v501 = vsub.f32 0.0, %v367
    %v502 = vsub.f32 0.0, %v430
    %v503 = vsub.f32 0.0, %v493
    %v504 = vsel %vm498, %v367, %v501
    %v505 = vsel %vm499, %v430, %v502
    %v506 = vsel %vm500, %v493, %v503
    %v507 = vmin.f32 %v504, 0.0
    %v508 = vmin.f32 %v505, 0.0
    %v509 = vmin.f32 %v506, 0.0
    %v510 = vand.u32 2147483647, %v504
    %v511 = vand.u32 2147483647, %v505
    %v512 = vand.u32 2147483647, %v506
    %v513 = vsub.f32 0.0, %v510
    %v514 = vsub.f32 0.0, %v511
    %v515 = vsub.f32 0.0, %v512
    %v516 = vmul.f32 %v513, 1.442695
    %v517 = vpow.pop %v516
    %v518 = vmul.f32 %v514, 1.442695
    %v519 = vpow.pop %v518
    %v520 = vmul.f32 %v515, 1.442695
    %v521 = vpow.pop %v520
    %v522 = vadd.f32 %v517, 1.0
    %v523 = vlog2.pop %v522
    %v524 = vmul.f32 %v523, 0.6931472
    %v525 = vmul.f32 -0.5, %v517
    %v526 = vadd.f32 %v525, 1.0
    %v527 = vmul.f32 %v526, %v517
    %v528 = vand.u32 2147483647, %v517
    %vm529 = vcmp.lt.f32.partialorder %v528, 0.0004427343
    %v530 = vsel %vm529, %v527, %v524
    %v531 = vadd.f32 %v519, 1.0
    %v532 = vlog2.pop %v531
    %v533 = vmul.f32 %v532, 0.6931472
    %v534 = vmul.f32 -0.5, %v519
    %v535 = vadd.f32 %v534, 1.0
    %v536 = vmul.f32 %v535, %v519
    %v537 = vand.u32 2147483647, %v519
    %vm538 = vcmp.lt.f32.partialorder %v537, 0.0004427343
    %v539 = vsel %vm538, %v536, %v533
    %v540 = vadd.f32 %v521, 1.0
    %v541 = vlog2.pop %v540
    %v542 = vmul.f32 %v541, 0.6931472
    %v543 = vmul.f32 -0.5, %v521
    %v544 = vadd.f32 %v543, 1.0
    %v545 = vmul.f32 %v544, %v521
    %v546 = vand.u32 2147483647, %v521
    %vm547 = vcmp.lt.f32.partialorder %v546, 0.0004427343
    %v548 = vsel %vm547, %v545, %v542
    %v549 = vsub.f32 %v507, %v530
    %v550 = vsub.f32 %v508, %v539
    %v551 = vsub.f32 %v509, %v548
    %v552 = vsel %vm304, %v549, 0.0
    %v553 = vsel %vm304, %v550, 0.0
    %v554 = vadd.f32 %v552, %v553
    %v555 = vsel %vm304, %v551, 0.0
    %v556 = vadd.f32 %v554, %v555
    %v557 = vrot.slane %v556, 4
    %v558 = vadd.f32 %v556, %v557
    %v559 = vrot.slane %v558, 2
    %v560 = vadd.f32 %v558, %v559
    %v561 = vrot.slane %v560, 1
    %v562 = vadd.f32 %v560, %v561
    %v563 = vsub.f32 0.0, %v562
    %vm564 = vcmask 57344
    %565 = vst.msk [vmem:[#allocation2] sm:$0x1] %vm564, %v563
    // Predicated region
    $region10: #{tpu_custom_call.1} parent=1 // pred_check
      _
    $region11: #{tpu_custom_call.1} parent=1 // pred_check_branch
      %567 = sbr.rel (0) target = $region13
    $region12: #{tpu_custom_call.1} parent=1 // pred_region
      %569 = vsyncadd [#allocation3], 0
      %s571 = sshll.u32 [#allocation2], 4
      %s572 = int_to_ptr.vmem [resolvable:$true] %s571
      %s573 = sshll.u32 %s2, 4
      %s574 = int_to_ptr.hbm [resolvable:$true] %s573
      %576 = dma.vmem_to_hbm [thread:$0]  %s572, 16, %s574, [#allocation3]
    $region13: #{tpu_custom_call.1} parent=1 // pred_fallthru
      _
    // Predicated region
    $region14: #{tpu_custom_call.1} parent=1 // pred_check
      _
    $region15: #{tpu_custom_call.1} parent=1 // pred_check_branch
      %578 = sbr.rel (0) target = $region17
    $region16: #{tpu_custom_call.1} parent=1 // pred_region
      %580 = dma.done [#allocation3], 16
    $region17: #{tpu_custom_call.1} parent=1 // pred_fallthru
      _
    %581 = vsyncpa [#allocation3], 1

</llo_original>
